<compile_context>
chip_gen: v5e
topology: v5e:2x2
jax: 0.10.0
libtpu: 0.0.40
codegen_flags: <defaults>
</compile_context>

<pallas_src>
import jax
import jax.numpy as jnp
from jax.experimental import pallas as pl
from jax.experimental.pallas import tpu as pltpu


def _categorical_kernel(x_ref, wt_ref, b_ref, out_ref):
    x = x_ref[...]                               # (TILE_B, K) — f32 or bf16
    wt = wt_ref[...]                             # (K, N), pre-transposed, same dtype as x
    b = b_ref[...].astype(jnp.float32)           # (1, N)

    # Linear: y = x @ W^T + b.  Weight already transposed in the wrapper, so
    # this is a straight MXU pass with f32 accumulation.
    y = jnp.dot(x, wt, preferred_element_type=jnp.float32) + b   # (TILE_B, N) f32

    # Normalized logits (what FixedCategorical stores): y - logsumexp(y, -1).
    # All reduction / exp / log math stays in f32.
    m = jnp.max(y, axis=-1, keepdims=True)
    e = jnp.exp(y - m)
    lse = m + jnp.log(jnp.sum(e, axis=-1, keepdims=True))
    out_ref[...] = (y - lse).astype(out_ref.dtype)


def categorical_forward(x, weight, bias, *, tile_b=512):
    """Normalized logits of Categorical(logits = x @ W^T + b).

    x:      (B, num_inputs)   f32 or bf16
    weight: (num_outputs, num_inputs)  (PyTorch nn.Linear layout)
    bias:   (num_outputs,)
    returns (B, num_outputs)  f32 normalized logits
    """
    B, K = x.shape
    N = weight.shape[0]

    # Pre-transpose the weight once outside the kernel (removes in-kernel w.T),
    # and match its dtype to x so the MXU sees homogeneous operands.
    w_t = weight.T.astype(x.dtype)               # (K, N)
    bias2d = bias.reshape(1, N).astype(jnp.float32)

    # Batch tiling: resident weight/bias, pipelined x/out blocks.
    tile_b = min(tile_b, B)
    b_pad = tile_b * pl.cdiv(B, tile_b)
    x_p = jnp.pad(x, ((0, b_pad - B), (0, 0))) if b_pad != B else x
    grid = (b_pad // tile_b,)

    cost = pl.CostEstimate(
        flops=2 * b_pad * K * N,
        transcendentals=2 * b_pad * N,             # exp + log per output element
        bytes_accessed=(x_p.size * x_p.dtype.itemsize
                        + w_t.size * w_t.dtype.itemsize
                        + bias2d.size * 4
                        + b_pad * N * 4),
    )

    out = pl.pallas_call(
        _categorical_kernel,
        out_shape=jax.ShapeDtypeStruct((b_pad, N), jnp.float32),
        grid=grid,
        in_specs=[
            pl.BlockSpec((tile_b, K), lambda i: (i, 0)),   # x: tiled over batch
            pl.BlockSpec((K, N), lambda i: (0, 0)),        # weight: VMEM-resident
            pl.BlockSpec((1, N), lambda i: (0, 0)),        # bias:   VMEM-resident
        ],
        out_specs=pl.BlockSpec((tile_b, N), lambda i: (i, 0)),
        compiler_params=pltpu.CompilerParams(
            dimension_semantics=("parallel",)),            # megacore on v7x
        cost_estimate=cost,
    )(x_p, w_t, bias2d)

    return out[:B] if b_pad != B else out


def orthogonal_init(key, shape, gain=1.0, dtype=jnp.float32):
    """Deterministic orthogonal init matching nn.init.orthogonal_ semantics."""
    rows, cols = shape
    n = max(rows, cols)
    a = jax.random.normal(key, (n, n), dtype=jnp.float32)
    q, r = jnp.linalg.qr(a)
    q = q * jnp.sign(jnp.diag(r))          # sign correction (as in PyTorch)
    return (gain * q[:rows, :cols]).astype(dtype)


def _reference(x, weight, bias):
    y = x.astype(jnp.float32) @ weight.T.astype(jnp.float32) + bias
    return y - jax.nn.logsumexp(y, axis=-1, keepdims=True)


if __name__ == "__main__":
    num_inputs = 32    # hidden size feeding the policy head
    num_outputs = 8    # number of discrete actions

    key = jax.random.PRNGKey(0)
    kx_small, kx_large, kw = jax.random.split(key, 3)

    # init_: orthogonal weight with gain=0.01, zero bias (module spec).
    weight = orthogonal_init(kw, (num_outputs, num_inputs), gain=0.01)
    bias = jnp.zeros((num_outputs,), dtype=jnp.float32)

    # --- small batch: single block (B <= TILE_B path) ---
    x_small = jax.random.normal(kx_small, (8, num_inputs), dtype=jnp.float32)
    logits_small = jax.block_until_ready(categorical_forward(x_small, weight, bias))
    ref_small = _reference(x_small, weight, bias)
    assert jnp.allclose(logits_small, ref_small, atol=1e-5, rtol=1e-5), "small-batch mismatch"
    assert jnp.allclose(jnp.sum(jnp.exp(logits_small), axis=-1), 1.0, atol=1e-5)

    # --- larger batch: exercises the batch grid + padding + parallel axis ---
    x_large = jax.random.normal(kx_large, (1040, num_inputs), dtype=jnp.float32)
    logits_large = jax.block_until_ready(
        categorical_forward(x_large, weight, bias, tile_b=512))
    ref_large = _reference(x_large, weight, bias)
    assert logits_large.shape == (1040, num_outputs)
    assert jnp.allclose(logits_large, ref_large, atol=1e-5, rtol=1e-5), "large-batch mismatch"
    assert jnp.allclose(jnp.sum(jnp.exp(logits_large), axis=-1), 1.0, atol=1e-5)

    print("KERNEL_OK")
</pallas_src>

<mosaic_0001>
module attributes {stable_mosaic.version = 11 : i64} {
  func.func @_categorical_kernel(%arg0: i32, %arg1: memref<8x32xf32, #tpu.memory_space<vmem>>, %arg2: memref<32x8xf32, #tpu.memory_space<vmem>>, %arg3: memref<1x8xf32, #tpu.memory_space<vmem>>, %arg4: memref<8x8xf32, #tpu.memory_space<vmem>>) attributes {dimension_semantics = [#tpu.dimension_semantics<parallel>], iteration_bounds = array<i64: 1>, scalar_prefetch = 0 : i64, scratch_operands = 0 : i64, tpu.core_type = #tpu.core_type<tc>, window_params = [{transform_indices = @transform_0, window_bounds = array<i64: 8, 32>}, {pipeline_mode = #tpu.pipeline_mode<synchronous>, transform_indices = @transform_1, window_bounds = array<i64: 32, 8>}, {pipeline_mode = #tpu.pipeline_mode<synchronous>, transform_indices = @transform_2, window_bounds = array<i64: 1, 8>}, {transform_indices = @transform_3, window_bounds = array<i64: 8, 8>}]} {
    %c0 = arith.constant 0 : index
    %c0_0 = arith.constant 0 : index
    %0 = vector.load %arg1[%c0, %c0_0] : memref<8x32xf32, #tpu.memory_space<vmem>>, vector<8x32xf32>
    %c0_1 = arith.constant 0 : index
    %c0_2 = arith.constant 0 : index
    %1 = vector.load %arg2[%c0_1, %c0_2] : memref<32x8xf32, #tpu.memory_space<vmem>>, vector<32x8xf32>
    %c0_3 = arith.constant 0 : index
    %c0_4 = arith.constant 0 : index
    %2 = vector.load %arg3[%c0_3, %c0_4] : memref<1x8xf32, #tpu.memory_space<vmem>>, vector<1x8xf32>
    %cst = arith.constant dense<0.000000e+00> : vector<8x8xf32>
    %3 = tpu.matmul %0, %1, %cst {dimension_numbers = #tpu.dot_dimension_numbers<[1], [0], [0], [1], [0, 0, 1, 1], [], []>} : vector<8x32xf32>, vector<32x8xf32>, vector<8x8xf32> -> vector<8x8xf32>
    %4 = vector.broadcast %2 : vector<1x8xf32> to vector<8x8xf32>
    %5 = arith.addf %3, %4 : vector<8x8xf32>
    %cst_5 = arith.constant dense<0xFF800000> : vector<8xf32>
    %6 = vector.multi_reduction <maximumf>, %5, %cst_5 [1] : vector<8x8xf32> to vector<8xf32>
    %7 = vector.shape_cast %6 : vector<8xf32> to vector<8x1xf32>
    %8 = vector.broadcast %7 : vector<8x1xf32> to vector<8x8xf32>
    %9 = arith.subf %5, %8 : vector<8x8xf32>
    %10 = math.exp %9 : vector<8x8xf32>
    %cst_6 = arith.constant dense<0.000000e+00> : vector<8xf32>
    %11 = vector.multi_reduction <add>, %10, %cst_6 [1] : vector<8x8xf32> to vector<8xf32>
    %12 = vector.shape_cast %11 : vector<8xf32> to vector<8x1xf32>
    %13 = math.log %12 : vector<8x1xf32>
    %14 = arith.addf %7, %13 : vector<8x1xf32>
    %15 = vector.broadcast %14 : vector<8x1xf32> to vector<8x8xf32>
    %16 = arith.subf %5, %15 : vector<8x8xf32>
    %c0_7 = arith.constant 0 : index
    %c0_8 = arith.constant 0 : index
    %17 = vector.load %arg4[%c0_7, %c0_8] : memref<8x8xf32, #tpu.memory_space<vmem>>, vector<8x8xf32>
    tpu.vector_store %arg4[%c0_7, %c0_8], %16 {strides = array<i32>} : memref<8x8xf32, #tpu.memory_space<vmem>>, vector<8x8xf32>,
    return
  }
  func.func @transform_0(%arg0: i32) -> (i32, i32) {
    %c0_i32 = arith.constant 0 : i32
    %c0_i32_0 = arith.constant 0 : i32
    return %arg0, %c0_i32 : i32, i32
  }
  func.func @transform_1(%arg0: i32) -> (i32, i32) {
    %c0_i32 = arith.constant 0 : i32
    %c0_i32_0 = arith.constant 0 : i32
    %c0_i32_1 = arith.constant 0 : i32
    return %c0_i32, %c0_i32_0 : i32, i32
  }
  func.func @transform_2(%arg0: i32) -> (i32, i32) {
    %c0_i32 = arith.constant 0 : i32
    %c0_i32_0 = arith.constant 0 : i32
    %c0_i32_1 = arith.constant 0 : i32
    return %c0_i32, %c0_i32_0 : i32, i32
  }
  func.func @transform_3(%arg0: i32) -> (i32, i32) {
    %c0_i32 = arith.constant 0 : i32
    %c0_i32_0 = arith.constant 0 : i32
    return %arg0, %c0_i32 : i32, i32
  }
}

</mosaic_0001>

<llo_original>
// kernel: tpu_custom_call.1
$region0: #{tpu_custom_call.1}
  #allocation0 [shape = 'u32[]', space=smem, size = 0x4, offset = 0x4, fixed_abs, tag = 'smem constant byte address 0x4 - core index']
  #allocation1 [shape = 'u32[72,128]{1,0:T(1,128)}', space=vmem, size = 0x9000, scoped, tag = 'internal scratch']
  %s0 = inlined_call_operand.vmem [shape: f32[8,32], index: 0, kind: input, shape index: {}]
  %s1 = inlined_call_operand.vmem [shape: f32[32,8], index: 1, kind: input, shape index: {}]
  %s2 = inlined_call_operand.vmem [shape: f32[1,8], index: 2, kind: input, shape index: {}]
  %s3 = inlined_call_operand.hbm [shape: f32[8,8], index: 3, kind: output, shape index: {}]
  %s4 = sld [smem:[#allocation0]]
  $region22: #{tpu_custom_call.1} parent=0
    _
  %s6 = ssub.s32 1, %s4
  %s7 = scalar_select 0, %s6, %s4
  $region1: #{tpu_custom_call.1} parent=0
    #allocation2 [shape = 'u8[4096]{0}', space=vmem, size = 0x1000, scoped, tag = 'output window, operand 0, single buffered']
    #allocation3 [shape = 's32[1]{0}', space=sflag, size = 0x4, scoped, tag = 'scoped memory for tpu_custom_call.1']
    %8 = vsyncpa [#allocation3], 0
    // Predicated region
    $region2: #{tpu_custom_call.1} parent=1 // pred_check
      _
    $region3: #{tpu_custom_call.1} parent=1 // pred_check_branch
      %10 = sbr.rel (0) target = $region5
    $region4: #{tpu_custom_call.1} parent=1 // pred_region
      _
    $region5: #{tpu_custom_call.1} parent=1 // pred_fallthru
      _
    // Predicated region
    $region6: #{tpu_custom_call.1} parent=1 // pred_check
      _
    $region7: #{tpu_custom_call.1} parent=1 // pred_check_branch
      %12 = sbr.rel (0) target = $region9
    $region8: #{tpu_custom_call.1} parent=1 // pred_region
      _
    $region9: #{tpu_custom_call.1} parent=1 // pred_fallthru
      _
    // Predicated region
    $region10: #{tpu_custom_call.1} parent=1 // pred_check
      _
    $region11: #{tpu_custom_call.1} parent=1 // pred_check_branch
      %14 = sbr.rel (0) target = $region13
    $region12: #{tpu_custom_call.1} parent=1 // pred_region
      _
    $region13: #{tpu_custom_call.1} parent=1 // pred_fallthru
      _
    %v15 = vld [vmem:[%s0] sm:$0xff]
    %v16 = vld [vmem:[%s1] sm:$0xff]
    %v17 = vld [vmem:[%s1 + $0x8] sm:$0xff]
    %v18 = vld [vmem:[%s1 + $0x10] sm:$0xff]
    %v19 = vld [vmem:[%s1 + $0x18] sm:$0xff]
    %v20 = vld [vmem:[%s2] sm:$0x1]
    %v22 = vperm.slane %v20, 0
    %vm24 = vcmask 261120
    %v26 = vsel %vm24, %v15, 0
    %28 = vmatpush.msra.mxu0 0.0
    %29 = vmatpush.msra.mxu0 0.0
    %30 = vmatpush.msra.mxu0 0.0
    %31 = vmatpush.msra.mxu0 0.0
    %32 = vmatpush.msra.mxu0 0.0
    %33 = vmatpush.msra.mxu0 0.0
    %34 = vmatpush.msra.mxu0 0.0
    %35 = vmatpush.msra.mxu0 0.0
    %36 = vmatpush.msra.mxu0 0.0
    %37 = vmatpush.msra.mxu0 0.0
    %38 = vmatpush.msra.mxu0 0.0
    %39 = vmatpush.msra.mxu0 0.0
    %40 = vmatpush.msra.mxu0 %v19
    %41 = vmatpush.msra.mxu0 %v18
    %42 = vmatpush.msra.mxu0 %v17
    %43 = vmatpush.msra.mxu0 %v16
    %44 = vmatmul.f32.gmra.mxu0 %v26
    %v45 = vpop.f32.mrf.mxu0
    %v46 = vadd.f32 %v22, %v45
    %47 = vdwg.mxu0
    %vm48 = vcmask 64512
    %v49 = vsel %vm48, %v46, -inf
    %50 = vmax.xlane.f32.xlu0 %v49
    %v51 = vpop.xlane.xlu0 %50
    %v52 = vsub.f32 %v46, %v51
    %v53 = vmul.f32 %v52, 1.442695
    %v54 = vpow.pop %v53
    %v55 = vsel %vm48, %v54, 0.0
    %56 = vadd.xlane.f32.xlu0 %v55
    %v57 = vpop.xlane.xlu0 %56
    %v58 = vlog2.pop %v57
    %v59 = vmul.f32 %v58, 0.6931472
    %v60 = vadd.f32 %v51, %v59
    %v61 = vsub.f32 %v46, %v60
    %62 = vst.msk [vmem:[#allocation2] sm:$0xff] %vm48, %v61
    // Predicated region
    $region14: #{tpu_custom_call.1} parent=1 // pred_check
      _
    $region15: #{tpu_custom_call.1} parent=1 // pred_check_branch
      %64 = sbr.rel (0) target = $region17
    $region16: #{tpu_custom_call.1} parent=1 // pred_region
      %66 = vsyncadd [#allocation3], 0
      %s68 = sshll.u32 [#allocation2], 4
      %s69 = int_to_ptr.vmem [resolvable:$true] %s68
      %s70 = sshll.u32 %s3, 4
      %s71 = int_to_ptr.hbm [resolvable:$true] %s70
      %73 = dma.vmem_to_hbm [thread:$0]  %s69, 128, %s71, [#allocation3]
    $region17: #{tpu_custom_call.1} parent=1 // pred_fallthru
      _
    // Predicated region
    $region18: #{tpu_custom_call.1} parent=1 // pred_check
      _
    $region19: #{tpu_custom_call.1} parent=1 // pred_check_branch
      %75 = sbr.rel (0) target = $region21
    $region20: #{tpu_custom_call.1} parent=1 // pred_region
      %77 = dma.done [#allocation3], 128
    $region21: #{tpu_custom_call.1} parent=1 // pred_fallthru
      _
    %78 = vsyncpa [#allocation3], 1

</llo_original>
